<compile_context>
chip_gen: v7x
topology: tpu7x:2x2x1
jax: 0.10.0
libtpu: 0.0.40
codegen_flags: <defaults>
</compile_context>

<pallas_src>
import math

import jax
import jax.numpy as jnp
from jax.experimental import pallas as pl
from jax.experimental.pallas import tpu as pltpu


def _round_up(x: int, m: int) -> int:
    return ((x + m - 1) // m) * m


def _cdiv(a: int, b: int) -> int:
    return -(-a // b)


# ---------------------------------------------------------------------------
# Fixed (sinusoidal) embedding table, matching FixedEmbedding.__init__ exactly.
# ---------------------------------------------------------------------------
def fixed_embedding_table(c_in: int, d_model: int) -> jnp.ndarray:
    position = jnp.arange(0, c_in, dtype=jnp.float32)[:, None]            # (c_in, 1)
    div_term = jnp.exp(
        jnp.arange(0, d_model, 2, dtype=jnp.float32)
        * -(math.log(10000.0) / d_model))                                 # (d/2,)
    w = jnp.zeros((c_in, d_model), dtype=jnp.float32)
    w = w.at[:, 0::2].set(jnp.sin(position * div_term))
    w = w.at[:, 1::2].set(jnp.cos(position * div_term))
    return w


# ---------------------------------------------------------------------------
# Kernels.  field_specs = ((x_column, vocab_offset), ...) are compile-time.
# ---------------------------------------------------------------------------
def _make_transposed_kernel(field_specs):
    """out^T = sum_p table_t[p] @ hot^T.  hot^T: (cin_pad, tile_r), rows on lanes."""
    (c0, o0), rest = field_specs[0], field_specs[1:]

    def kernel(xt_ref, table_ref, out_ref):
        cin = table_ref.shape[-1]
        tile_r = out_ref.shape[-1]
        # Concatenated-vocab ids vary along the sublane axis; token rows on lanes.
        row_ids = jax.lax.broadcasted_iota(jnp.int32, (cin, tile_r), 0)
        # Per-field offsets keep field ranges disjoint -> OR of one-hots == multi-hot.
        hot = row_ids == (xt_ref[c0:c0 + 1, :] + o0)
        for c, o in rest:                                     # static 3-4 iterations
            hot = jnp.logical_or(hot, row_ids == (xt_ref[c:c + 1, :] + o))
        h = hot.astype(table_ref.dtype)                       # 0/1 exact in bf16 too
        acc = jnp.dot(table_ref[0], h, preferred_element_type=jnp.float32)
        for p in range(1, table_ref.shape[0]):                # bf16 hi/lo split path
            acc = acc + jnp.dot(table_ref[p], h, preferred_element_type=jnp.float32)
        out_ref[...] = acc                                    # lane-dense (d, tile_r) store

    return kernel


def _make_direct_kernel(field_specs):
    """out = sum_p hot @ table[p].  Used when d_model % 128 == 0 (lane-dense as-is)."""
    (c0, o0), rest = field_specs[0], field_specs[1:]

    def kernel(idx_ref, table_ref, out_ref):
        cin = table_ref.shape[1]
        tile_r = out_ref.shape[0]
        col_ids = jax.lax.broadcasted_iota(jnp.int32, (tile_r, cin), 1)
        hot = col_ids == (idx_ref[:, c0:c0 + 1] + o0)
        for c, o in rest:
            hot = jnp.logical_or(hot, col_ids == (idx_ref[:, c:c + 1] + o))
        h = hot.astype(table_ref.dtype)
        acc = jnp.dot(h, table_ref[0], preferred_element_type=jnp.float32)
        for p in range(1, table_ref.shape[0]):
            acc = acc + jnp.dot(h, table_ref[p], preferred_element_type=jnp.float32)
        out_ref[...] = acc

    return kernel


# ---------------------------------------------------------------------------
# Wrapper: parameter setup + index plumbing in plain JAX, compute in Pallas.
# ---------------------------------------------------------------------------
class TemporalEmbeddingPallas:
    # (name, vocab size, x column) in concatenation order.
    _BASE_FIELDS = (("hour", 24, 3), ("weekday", 7, 2), ("day", 32, 1), ("month", 13, 0))
    _MINUTE_FIELD = ("minute", 4, 4)

    def __init__(self, d_model: int, embed_type: str = "fixed", freq: str = "h",
                 tile_rows: int = 2048, use_bf16_split: bool = False):
        # TODO(synk): embed_type != 'fixed' (learned nn.Embedding tables) would use the
        #             identical kernel with trainable tables; not modeled here.
        assert embed_type == "fixed", "only the 'fixed' (sinusoidal) variant is implemented"
        assert d_model % 2 == 0, "odd d_model unsupported (same limitation as PyTorch FixedEmbedding)"
        self.d_model = d_model
        self.freq = freq
        self.tile_rows = max(128, tile_rows)          # sweepable; 1024-2048 recommended

        fields = list(self._BASE_FIELDS)
        if freq == "t":
            fields.append(self._MINUTE_FIELD)
        self.fields = fields
        self._min_cols = max(col for _, _, col in fields) + 1

        sizes = [s for _, s, _ in fields]
        offsets, off = [], 0
        for s in sizes:
            offsets.append(off)
            off += s
        cin_total = off
        self.cin_pad = _round_up(cin_total, 128)      # matmul K dim / table lane dim
        self._field_specs = tuple((col, o) for (_, _, col), o in zip(fields, offsets))

        # d_model % 128 == 0 -> direct (tile_r, d_model) output: lane-dense, copy-free return.
        # otherwise          -> transposed (d_model, tile_r) output: rows on the lane axis,
        #                       no 128-lane padding of d_model; wrapper transposes back.
        self.transposed = (d_model % 128 != 0)
        self.d_store = _round_up(d_model, 8) if self.transposed else d_model

        concat = jnp.concatenate([fixed_embedding_table(s, d_model) for s in sizes], axis=0)
        base = jnp.pad(concat, ((0, self.cin_pad - cin_total), (0, self.d_store - d_model)))
        if self.transposed:
            base = base.T                             # (d_store, cin_pad)
        if use_bf16_split:
            # Exact-ish (~2^-16 rel) split: table = hi + lo, both bf16.  Two bf16 MXU
            # passes beat one f32xf32 pass (~3-6 bf16-equivalent); biggest win on v5e.
            hi = base.astype(jnp.bfloat16)
            lo = (base - hi.astype(jnp.float32)).astype(jnp.bfloat16)
            self.table = jnp.stack([hi, lo], axis=0)  # (2, ., .)
        else:
            self.table = base[None]                   # (1, ., .) float32, bit-exact

        self._kernel = (_make_transposed_kernel(self._field_specs) if self.transposed
                        else _make_direct_kernel(self._field_specs))

    def __call__(self, x: jnp.ndarray) -> jnp.ndarray:
        # x: (B, L, C) integer time features; columns [month, day, weekday, hour, (minute)].
        # NOTE: correctness relies on in-range indices (hour<24, day<32, ...); out-of-range
        # values silently alias into a neighboring field's rows (PyTorch nn.Embedding would
        # raise).  For freq='t' the minute column must already be bucketed to 0..3.
        x = x.astype(jnp.int32)
        B, L, C = x.shape
        assert C >= self._min_cols, "x has too few time-feature columns for this freq"
        rows = B * L

        # Adaptive, balanced row tiles: >=2 grid steps when there is enough work (so v7x's
        # two TensorCores both get tiles), size capped by tile_rows, padding waste bounded.
        min_tile = 128 if self.transposed else 8      # lane vs sublane granularity
        n_tiles = _cdiv(rows, self.tile_rows)
        if n_tiles < 2 and rows > min_tile:
            n_tiles = 2
        tile_r = _round_up(_cdiv(rows, n_tiles), min_tile)
        n_tiles = _cdiv(rows, tile_r)
        rows_pad = n_tiles * tile_r

        xf = x.reshape(rows, C)
        n_parts = int(self.table.shape[0])
        tab_bytes = int(self.table.size) * self.table.dtype.itemsize
        d_out = self.d_store if self.transposed else self.d_model

        cost = pl.CostEstimate(
            flops=int(2 * n_parts * self.cin_pad * d_out * rows_pad),
            transcendentals=0,
            bytes_accessed=int(rows_pad * C * 4 + tab_bytes + rows_pad * d_out * 4),
        )

        if self.transposed:
            # (C, rows_pad): contiguous per-field DMA rows; pad rows are sliced away below.
            xt = jnp.pad(xf.T, ((0, 0), (0, rows_pad - rows)))
            vmem = (2 * _round_up(C, 8) * tile_r * 4          # idx blocks (double-buffered)
                    + 2 * tab_bytes                           # resident table (constant index map)
                    + 2 * d_out * tile_r * 4                  # output blocks
                    + self.cin_pad * tile_r * 4)              # multi-hot intermediate
            out_t = pl.pallas_call(
                self._kernel,
                out_shape=jax.ShapeDtypeStruct((d_out, rows_pad), jnp.float32),
                grid=(n_tiles,),
                in_specs=[
                    pl.BlockSpec((C, tile_r), lambda i: (0, i)),
                    # Constant block index -> table stays resident in VMEM across steps.
                    pl.BlockSpec(self.table.shape, lambda i: (0, 0, 0)),
                ],
                out_specs=pl.BlockSpec((d_out, tile_r), lambda i: (0, i)),
                compiler_params=pltpu.CompilerParams(
                    dimension_semantics=("parallel",),
                    vmem_limit_bytes=min(int(vmem) + (16 << 20), 48 << 20),
                ),
                cost_estimate=cost,
            )(xt, self.table)
            # One small transpose pass instead of writing/re-reading a 128-lane-padded buffer.
            return out_t[:self.d_model, :rows].T.reshape(B, L, self.d_model)

        # Direct path: d_model % 128 == 0, output already lane-dense; return is a reshape.
        idx = xf if rows_pad == rows else jnp.pad(xf, ((0, rows_pad - rows), (0, 0)))
        vmem = (2 * tile_r * 128 * 4                          # idx blocks (C lane-padded in VMEM)
                + 2 * tab_bytes
                + 2 * tile_r * d_out * 4
                + tile_r * self.cin_pad * 4)
        out = pl.pallas_call(
            self._kernel,
            out_shape=jax.ShapeDtypeStruct((rows_pad, d_out), jnp.float32),
            grid=(n_tiles,),
            in_specs=[
                pl.BlockSpec((tile_r, C), lambda i: (i, 0)),
                pl.BlockSpec(self.table.shape, lambda i: (0, 0, 0)),
            ],
            out_specs=pl.BlockSpec((tile_r, d_out), lambda i: (i, 0)),
            compiler_params=pltpu.CompilerParams(
                dimension_semantics=("parallel",),
                vmem_limit_bytes=min(int(vmem) + (16 << 20), 48 << 20),
            ),
            cost_estimate=cost,
        )(idx, self.table)
        out = out if rows_pad == rows else out[:rows]
        return out.reshape(B, L, self.d_model)


# ---------------------------------------------------------------------------
# Reference (pure JAX) for correctness checks.
# ---------------------------------------------------------------------------
def temporal_embedding_ref(mod: TemporalEmbeddingPallas, x: jnp.ndarray) -> jnp.ndarray:
    x = x.astype(jnp.int32)
    out = jnp.zeros(x.shape[:2] + (mod.d_model,), jnp.float32)
    for _, size, col in mod.fields:
        w = fixed_embedding_table(size, mod.d_model)
        out = out + jnp.take(w, x[:, :, col], axis=0)
    return out


if __name__ == "__main__":
    key = jax.random.PRNGKey(0)

    def make_x(k, B, L, with_minute=False):
        ks = jax.random.split(k, 5)
        month = jax.random.randint(ks[0], (B, L), 0, 13)
        day = jax.random.randint(ks[1], (B, L), 0, 32)
        weekday = jax.random.randint(ks[2], (B, L), 0, 7)
        hour = jax.random.randint(ks[3], (B, L), 0, 24)
        cols = [month, day, weekday, hour]
        if with_minute:
            cols.append(jax.random.randint(ks[4], (B, L), 0, 4))
        return jnp.stack(cols, axis=-1).astype(jnp.int32)

    k0, k1, k2, k3 = jax.random.split(key, 4)

    # 1) small shape, d_model=32 -> transposed-output path, single tile.
    mod32 = TemporalEmbeddingPallas(d_model=32, embed_type="fixed", freq="h")
    x_small = make_x(k0, 2, 8)
    out = jax.block_until_ready(mod32(x_small))
    ref = temporal_embedding_ref(mod32, x_small)
    assert out.shape == (2, 8, 32)
    assert jnp.allclose(out, ref, atol=1e-5, rtol=1e-5), "small mismatch vs reference"

    # 2) multi-tile row grid with row padding (transposed path, 1200 rows -> 2x640).
    x_big = make_x(k1, 4, 300)
    out = jax.block_until_ready(mod32(x_big))
    ref = temporal_embedding_ref(mod32, x_big)
    assert out.shape == (4, 300, 32)
    assert jnp.allclose(out, ref, atol=1e-5, rtol=1e-5), "big mismatch vs reference"

    # 3) d_model % 128 == 0 -> direct lane-dense, copy-free path.
    mod128 = TemporalEmbeddingPallas(d_model=128, embed_type="fixed", freq="h")
    x_mid = make_x(k2, 2, 16)
    out = jax.block_until_ready(mod128(x_mid))
    ref = temporal_embedding_ref(mod128, x_mid)
    assert out.shape == (2, 16, 128)
    assert jnp.allclose(out, ref, atol=1e-5, rtol=1e-5), "d128 mismatch vs reference"

    # 4) freq='t' (adds the 4-bucket minute embedding, 5 input columns).
    mod_t = TemporalEmbeddingPallas(d_model=32, embed_type="fixed", freq="t")
    x_t = make_x(k3, 2, 8, with_minute=True)
    out = jax.block_until_ready(mod_t(x_t))
    ref = temporal_embedding_ref(mod_t, x_t)
    assert jnp.allclose(out, ref, atol=1e-5, rtol=1e-5), "freq='t' mismatch vs reference"

    # 5) bf16 split-table fast path (mainly a v5e MXU-throughput win), ~2^-16 rel error.
    mod_bf = TemporalEmbeddingPallas(d_model=32, embed_type="fixed", freq="h",
                                     use_bf16_split=True)
    out = jax.block_until_ready(mod_bf(x_big))
    ref = temporal_embedding_ref(mod_bf, x_big)
    assert jnp.allclose(out, ref, atol=1e-3), "bf16 split-table mismatch vs reference"

    print("KERNEL_OK")
</pallas_src>

<mosaic_0001>
module attributes {stable_mosaic.version = 11 : i64} {
  func.func @kernel(%arg0: i32, %arg1: memref<4x128xi32, #tpu.memory_space<vmem>>, %arg2: memref<1x32x128xf32, #tpu.memory_space<vmem>>, %arg3: memref<32x128xf32, #tpu.memory_space<vmem>>) attributes {dimension_semantics = [#tpu.dimension_semantics<parallel>], iteration_bounds = array<i64: 1>, scalar_prefetch = 0 : i64, scratch_operands = 0 : i64, tpu.core_type = #tpu.core_type<tc>, window_params = [{transform_indices = @transform_0, window_bounds = array<i64: 4, 128>}, {pipeline_mode = #tpu.pipeline_mode<synchronous>, transform_indices = @transform_1, window_bounds = array<i64: 1, 32, 128>}, {transform_indices = @transform_2, window_bounds = array<i64: 32, 128>}]} {
    %0 = tpu.iota {dimensions = array<i32: 0>} : vector<128x128xi32>
    %c3 = arith.constant 3 : index
    %c0 = arith.constant 0 : index
    %1 = vector.load %arg1[%c3, %c0] : memref<4x128xi32, #tpu.memory_space<vmem>>, vector<1x128xi32>
    %c0_i32 = arith.constant 0 : i32
    %2 = vector.broadcast %c0_i32 : i32 to vector<1x128xi32>
    %3 = arith.addi %1, %2 : vector<1x128xi32>
    %4 = vector.broadcast %3 : vector<1x128xi32> to vector<128x128xi32>
    %5 = arith.cmpi eq, %0, %4 : vector<128x128xi32>
    %c2 = arith.constant 2 : index
    %c0_0 = arith.constant 0 : index
    %6 = vector.load %arg1[%c2, %c0_0] : memref<4x128xi32, #tpu.memory_space<vmem>>, vector<1x128xi32>
    %c24_i32 = arith.constant 24 : i32
    %7 = vector.broadcast %c24_i32 : i32 to vector<1x128xi32>
    %8 = arith.addi %6, %7 : vector<1x128xi32>
    %9 = vector.broadcast %8 : vector<1x128xi32> to vector<128x128xi32>
    %10 = arith.cmpi eq, %0, %9 : vector<128x128xi32>
    %11 = arith.ori %5, %10 : vector<128x128xi1>
    %c1 = arith.constant 1 : index
    %c0_1 = arith.constant 0 : index
    %12 = vector.load %arg1[%c1, %c0_1] : memref<4x128xi32, #tpu.memory_space<vmem>>, vector<1x128xi32>
    %c31_i32 = arith.constant 31 : i32
    %13 = vector.broadcast %c31_i32 : i32 to vector<1x128xi32>
    %14 = arith.addi %12, %13 : vector<1x128xi32>
    %15 = vector.broadcast %14 : vector<1x128xi32> to vector<128x128xi32>
    %16 = arith.cmpi eq, %0, %15 : vector<128x128xi32>
    %17 = arith.ori %11, %16 : vector<128x128xi1>
    %c0_2 = arith.constant 0 : index
    %c0_3 = arith.constant 0 : index
    %18 = vector.load %arg1[%c0_2, %c0_3] : memref<4x128xi32, #tpu.memory_space<vmem>>, vector<1x128xi32>
    %c63_i32 = arith.constant 63 : i32
    %19 = vector.broadcast %c63_i32 : i32 to vector<1x128xi32>
    %20 = arith.addi %18, %19 : vector<1x128xi32>
    %21 = vector.broadcast %20 : vector<1x128xi32> to vector<128x128xi32>
    %22 = arith.cmpi eq, %0, %21 : vector<128x128xi32>
    %23 = arith.ori %17, %22 : vector<128x128xi1>
    %24 = arith.extui %23 : vector<128x128xi1> to vector<128x128xi32>
    %25 = arith.sitofp %24 : vector<128x128xi32> to vector<128x128xf32>
    %c0_4 = arith.constant 0 : index
    %c0_5 = arith.constant 0 : index
    %c0_6 = arith.constant 0 : index
    %26 = vector.load %arg2[%c0_4, %c0_5, %c0_6] : memref<1x32x128xf32, #tpu.memory_space<vmem>>, vector<1x32x128xf32>
    %27 = vector.shape_cast %26 : vector<1x32x128xf32> to vector<32x128xf32>
    %cst = arith.constant dense<0.000000e+00> : vector<32x128xf32>
    %28 = tpu.matmul %27, %25, %cst {dimension_numbers = #tpu.dot_dimension_numbers<[1], [0], [0], [1], [0, 0, 1, 1], [], []>} : vector<32x128xf32>, vector<128x128xf32>, vector<32x128xf32> -> vector<32x128xf32>
    %c0_7 = arith.constant 0 : index
    %c0_8 = arith.constant 0 : index
    %29 = vector.load %arg3[%c0_7, %c0_8] : memref<32x128xf32, #tpu.memory_space<vmem>>, vector<32x128xf32>
    tpu.vector_store %arg3[%c0_7, %c0_8], %28 {strides = array<i32>} : memref<32x128xf32, #tpu.memory_space<vmem>>, vector<32x128xf32>,
    return
  }
  func.func @transform_0(%arg0: i32) -> (i32, i32) {
    %c0_i32 = arith.constant 0 : i32
    %c0_i32_0 = arith.constant 0 : i32
    return %c0_i32, %arg0 : i32, i32
  }
  func.func @transform_1(%arg0: i32) -> (i32, i32, i32) {
    %c0_i32 = arith.constant 0 : i32
    %c0_i32_0 = arith.constant 0 : i32
    %c0_i32_1 = arith.constant 0 : i32
    %c0_i32_2 = arith.constant 0 : i32
    return %c0_i32, %c0_i32_0, %c0_i32_1 : i32, i32, i32
  }
  func.func @transform_2(%arg0: i32) -> (i32, i32) {
    %c0_i32 = arith.constant 0 : i32
    %c0_i32_0 = arith.constant 0 : i32
    return %c0_i32, %arg0 : i32, i32
  }
}

</mosaic_0001>

<llo_original>
// kernel: tpu_custom_call.1
$region0: #{tpu_custom_call.1}
  #allocation0 [shape = 'u32[]', space=smem, size = 0x4, offset = 0x4, fixed_abs, tag = 'smem constant byte address 0x4 - core index']
  #allocation1 [shape = 'u32[144,128]{1,0:T(1,128)}', space=vmem, size = 0x12000, scoped, tag = 'internal scratch']
  %s0 = inlined_call_operand.hbm [shape: s32[4,128], index: 0, kind: input, shape index: {}]
  %s1 = inlined_call_operand.hbm [shape: f32[1,32,128], index: 1, kind: input, shape index: {}]
  %s2 = inlined_call_operand.hbm [shape: f32[32,128], index: 2, kind: output, shape index: {}]
  %s3 = sld [smem:[#allocation0]]
  $region26: #{tpu_custom_call.1} parent=0
    _
  %s5 = ssub.s32 1, %s3
  %s6 = scalar_select 0, %s5, %s3
  $region1: #{tpu_custom_call.1} parent=0
    #allocation2 [shape = 'u8[2048]{0}', space=vmem, size = 0x800, scoped, tag = 'input window, operand 0, single buffered']
    #allocation3 [shape = 's32[1]{0}', space=sflag, size = 0x4, scoped, tag = 'scoped memory for tpu_custom_call.1']
    #allocation4 [shape = 's32[1]{0}', space=sflag, size = 0x4, scoped, tag = 'scoped memory for tpu_custom_call.1']
    #allocation5 [shape = 'u8[16384]{0}', space=vmem, size = 0x4000, scoped, tag = 'input window, operand 1, single buffered']
    #allocation6 [shape = 's32[1]{0}', space=sflag, size = 0x4, scoped, tag = 'scoped memory for tpu_custom_call.1']
    #allocation7 [shape = 'u8[16384]{0}', space=vmem, size = 0x4000, scoped, tag = 'output window, operand 0, single buffered']
    %7 = vsyncpa [#allocation3], 0
    %8 = vsyncpa [#allocation6], 0
    %9 = vsyncpa [#allocation4], 0
    // Predicated region
    $region2: #{tpu_custom_call.1} parent=1 // pred_check
      _
    $region3: #{tpu_custom_call.1} parent=1 // pred_check_branch
      %11 = sbr.rel (0) target = $region5
    $region4: #{tpu_custom_call.1} parent=1 // pred_region
      %s13 = ssub.s32 64, 64
      %14 = vsyncadd [#allocation3], %s13
      %s16 = sshll.u32 [#allocation2], 4
      %s17 = int_to_ptr.vmem [resolvable:$true] %s16
      %19 = dma.hbm_to_vmem [thread:$0]  %s0, 64, %s17, [#allocation3]
    $region5: #{tpu_custom_call.1} parent=1 // pred_fallthru
      _
    // Predicated region
    $region6: #{tpu_custom_call.1} parent=1 // pred_check
      _
    $region7: #{tpu_custom_call.1} parent=1 // pred_check_branch
      %21 = sbr.rel (0) target = $region9
    $region8: #{tpu_custom_call.1} parent=1 // pred_region
      %s23 = ssub.s32 512, 512
      %24 = vsyncadd [#allocation6], %s23
      %s25 = sshll.u32 [#allocation5], 4
      %s26 = int_to_ptr.vmem [resolvable:$true] %s25
      %31 = dma.hbm_to_vmem [thread:$0]  %s1, 512, %s26, [#allocation6], 128, 128, 8
    $region9: #{tpu_custom_call.1} parent=1 // pred_fallthru
      _
    // Predicated region
    $region10: #{tpu_custom_call.1} parent=1 // pred_check
      _
    $region11: #{tpu_custom_call.1} parent=1 // pred_check_branch
      %33 = sbr.rel (0) target = $region13
    $region12: #{tpu_custom_call.1} parent=1 // pred_region
      %34 = dma.done [#allocation3], 64
    $region13: #{tpu_custom_call.1} parent=1 // pred_fallthru
      _
    // Predicated region
    $region14: #{tpu_custom_call.1} parent=1 // pred_check
      _
    $region15: #{tpu_custom_call.1} parent=1 // pred_check_branch
      %36 = sbr.rel (0) target = $region17
    $region16: #{tpu_custom_call.1} parent=1 // pred_region
      %37 = dma.done [#allocation6], 512
    $region17: #{tpu_custom_call.1} parent=1 // pred_fallthru
      _
    %v38 = vlaneseq
    %v39 = vshrl.u32 %v38, 7
    %v40 = vadd.s32 %v39, 8
    %v41 = vadd.s32 %v39, 16
    %v42 = vadd.s32 %v39, 24
    %v43 = vadd.s32 %v39, 32
    %v44 = vadd.s32 %v39, 40
    %v45 = vadd.s32 %v39, 48
    %v46 = vadd.s32 %v39, 56
    %v47 = vadd.s32 %v39, 64
    %v48 = vadd.s32 %v39, 72
    %v49 = vadd.s32 %v39, 80
    %v50 = vadd.s32 %v39, 88
    %v51 = vadd.s32 %v39, 96
    %v52 = vadd.s32 %v39, 104
    %v53 = vadd.s32 %v39, 112
    %v54 = vadd.s32 %v39, 120
    %v55 = vld [vmem:[#allocation2 + $0x3] sm:$0x1]
    %v56 = vlaneseq
    %v57 = vshrl.u32 %v56, 7
    %v58 = vsub.s32 0, %v57
    %v59 = vrot.slane %v55, %v58
    %vm60 = vcmp.eq.s32.totalorder %v39, %v59
    %vm61 = vcmp.eq.s32.totalorder %v40, %v59
    %vm62 = vcmp.eq.s32.totalorder %v41, %v59
    %vm63 = vcmp.eq.s32.totalorder %v42, %v59
    %vm64 = vcmp.eq.s32.totalorder %v43, %v59
    %vm65 = vcmp.eq.s32.totalorder %v44, %v59
    %vm66 = vcmp.eq.s32.totalorder %v45, %v59
    %vm67 = vcmp.eq.s32.totalorder %v46, %v59
    %vm68 = vcmp.eq.s32.totalorder %v47, %v59
    %vm69 = vcmp.eq.s32.totalorder %v48, %v59
    %vm70 = vcmp.eq.s32.totalorder %v49, %v59
    %vm71 = vcmp.eq.s32.totalorder %v50, %v59
    %vm72 = vcmp.eq.s32.totalorder %v51, %v59
    %vm73 = vcmp.eq.s32.totalorder %v52, %v59
    %vm74 = vcmp.eq.s32.totalorder %v53, %v59
    %vm75 = vcmp.eq.s32.totalorder %v54, %v59
    %v76 = vld [vmem:[#allocation2 + $0x2] sm:$0x1]
    %v77 = vadd.s32 %v76, 24
    %v78 = vlaneseq
    %v79 = vshrl.u32 %v78, 7
    %v80 = vsub.s32 0, %v79
    %v81 = vrot.slane %v77, %v80
    %vm82 = vcmp.eq.s32.totalorder %v39, %v81
    %vm83 = vcmp.eq.s32.totalorder %v40, %v81
    %vm84 = vcmp.eq.s32.totalorder %v41, %v81
    %vm85 = vcmp.eq.s32.totalorder %v42, %v81
    %vm86 = vcmp.eq.s32.totalorder %v43, %v81
    %vm87 = vcmp.eq.s32.totalorder %v44, %v81
    %vm88 = vcmp.eq.s32.totalorder %v45, %v81
    %vm89 = vcmp.eq.s32.totalorder %v46, %v81
    %vm90 = vcmp.eq.s32.totalorder %v47, %v81
    %vm91 = vcmp.eq.s32.totalorder %v48, %v81
    %vm92 = vcmp.eq.s32.totalorder %v49, %v81
    %vm93 = vcmp.eq.s32.totalorder %v50, %v81
    %vm94 = vcmp.eq.s32.totalorder %v51, %v81
    %vm95 = vcmp.eq.s32.totalorder %v52, %v81
    %vm96 = vcmp.eq.s32.totalorder %v53, %v81
    %vm97 = vcmp.eq.s32.totalorder %v54, %v81
    %vm98 = vmor %vm60, %vm82
    %vm99 = vmor %vm61, %vm83
    %vm100 = vmor %vm62, %vm84
    %vm101 = vmor %vm63, %vm85
    %vm102 = vmor %vm64, %vm86
    %vm103 = vmor %vm65, %vm87
    %vm104 = vmor %vm66, %vm88
    %vm105 = vmor %vm67, %vm89
    %vm106 = vmor %vm68, %vm90
    %vm107 = vmor %vm69, %vm91
    %vm108 = vmor %vm70, %vm92
    %vm109 = vmor %vm71, %vm93
    %vm110 = vmor %vm72, %vm94
    %vm111 = vmor %vm73, %vm95
    %vm112 = vmor %vm74, %vm96
    %vm113 = vmor %vm75, %vm97
    %v114 = vld [vmem:[#allocation2 + $0x1] sm:$0x1]
    %v115 = vadd.s32 %v114, 31
    %v116 = vlaneseq
    %v117 = vshrl.u32 %v116, 7
    %v118 = vsub.s32 0, %v117
    %v119 = vrot.slane %v115, %v118
    %vm120 = vcmp.eq.s32.totalorder %v39, %v119
    %vm121 = vcmp.eq.s32.totalorder %v40, %v119
    %vm122 = vcmp.eq.s32.totalorder %v41, %v119
    %vm123 = vcmp.eq.s32.totalorder %v42, %v119
    %vm124 = vcmp.eq.s32.totalorder %v43, %v119
    %vm125 = vcmp.eq.s32.totalorder %v44, %v119
    %vm126 = vcmp.eq.s32.totalorder %v45, %v119
    %vm127 = vcmp.eq.s32.totalorder %v46, %v119
    %vm128 = vcmp.eq.s32.totalorder %v47, %v119
    %vm129 = vcmp.eq.s32.totalorder %v48, %v119
    %vm130 = vcmp.eq.s32.totalorder %v49, %v119
    %vm131 = vcmp.eq.s32.totalorder %v50, %v119
    %vm132 = vcmp.eq.s32.totalorder %v51, %v119
    %vm133 = vcmp.eq.s32.totalorder %v52, %v119
    %vm134 = vcmp.eq.s32.totalorder %v53, %v119
    %vm135 = vcmp.eq.s32.totalorder %v54, %v119
    %vm136 = vmor %vm98, %vm120
    %vm137 = vmor %vm99, %vm121
    %vm138 = vmor %vm100, %vm122
    %vm139 = vmor %vm101, %vm123
    %vm140 = vmor %vm102, %vm124
    %vm141 = vmor %vm103, %vm125
    %vm142 = vmor %vm104, %vm126
    %vm143 = vmor %vm105, %vm127
    %vm144 = vmor %vm106, %vm128
    %vm145 = vmor %vm107, %vm129
    %vm146 = vmor %vm108, %vm130
    %vm147 = vmor %vm109, %vm131
    %vm148 = vmor %vm110, %vm132
    %vm149 = vmor %vm111, %vm133
    %vm150 = vmor %vm112, %vm134
    %vm151 = vmor %vm113, %vm135
    %v152 = vld [vmem:[#allocation2] sm:$0x1]
    %v153 = vadd.s32 %v152, 63
    %v154 = vlaneseq
    %v155 = vshrl.u32 %v154, 7
    %v156 = vsub.s32 0, %v155
    %v157 = vrot.slane %v153, %v156
    %vm158 = vcmp.eq.s32.totalorder %v39, %v157
    %vm159 = vcmp.eq.s32.totalorder %v40, %v157
    %vm160 = vcmp.eq.s32.totalorder %v41, %v157
    %vm161 = vcmp.eq.s32.totalorder %v42, %v157
    %vm162 = vcmp.eq.s32.totalorder %v43, %v157
    %vm163 = vcmp.eq.s32.totalorder %v44, %v157
    %vm164 = vcmp.eq.s32.totalorder %v45, %v157
    %vm165 = vcmp.eq.s32.totalorder %v46, %v157
    %vm166 = vcmp.eq.s32.totalorder %v47, %v157
    %vm167 = vcmp.eq.s32.totalorder %v48, %v157
    %vm168 = vcmp.eq.s32.totalorder %v49, %v157
    %vm169 = vcmp.eq.s32.totalorder %v50, %v157
    %vm170 = vcmp.eq.s32.totalorder %v51, %v157
    %vm171 = vcmp.eq.s32.totalorder %v52, %v157
    %vm172 = vcmp.eq.s32.totalorder %v53, %v157
    %vm173 = vcmp.eq.s32.totalorder %v54, %v157
    %vm174 = vmor %vm136, %vm158
    %vm175 = vmor %vm137, %vm159
    %vm176 = vmor %vm138, %vm160
    %vm177 = vmor %vm139, %vm161
    %vm178 = vmor %vm140, %vm162
    %vm179 = vmor %vm141, %vm163
    %vm180 = vmor %vm142, %vm164
    %vm181 = vmor %vm143, %vm165
    %vm182 = vmor %vm144, %vm166
    %vm183 = vmor %vm145, %vm167
    %vm184 = vmor %vm146, %vm168
    %vm185 = vmor %vm147, %vm169
    %vm186 = vmor %vm148, %vm170
    %vm187 = vmor %vm149, %vm171
    %vm188 = vmor %vm150, %vm172
    %vm189 = vmor %vm151, %vm173
    %v190 = vsel %vm174, 1, 0
    %v191 = vsel %vm175, 1, 0
    %v192 = vsel %vm176, 1, 0
    %v193 = vsel %vm177, 1, 0
    %v194 = vsel %vm178, 1, 0
    %v195 = vsel %vm179, 1, 0
    %v196 = vsel %vm180, 1, 0
    %v197 = vsel %vm181, 1, 0
    %v198 = vsel %vm182, 1, 0
    %v199 = vsel %vm183, 1, 0
    %v200 = vsel %vm184, 1, 0
    %v201 = vsel %vm185, 1, 0
    %v202 = vsel %vm186, 1, 0
    %v203 = vsel %vm187, 1, 0
    %v204 = vsel %vm188, 1, 0
    %v205 = vsel %vm189, 1, 0
    %v206 = vcvt.s32.f32 %v190
    %v207 = vcvt.s32.f32 %v191
    %v208 = vcvt.s32.f32 %v192
    %v209 = vcvt.s32.f32 %v193
    %v210 = vcvt.s32.f32 %v194
    %v211 = vcvt.s32.f32 %v195
    %v212 = vcvt.s32.f32 %v196
    %v213 = vcvt.s32.f32 %v197
    %v214 = vcvt.s32.f32 %v198
    %v215 = vcvt.s32.f32 %v199
    %v216 = vcvt.s32.f32 %v200
    %v217 = vcvt.s32.f32 %v201
    %v218 = vcvt.s32.f32 %v202
    %v219 = vcvt.s32.f32 %v203
    %v220 = vcvt.s32.f32 %v204
    %v221 = vcvt.s32.f32 %v205
    %v222 = vld [vmem:[#allocation5] sm:$0xff]
    %v223 = vld [vmem:[#allocation5 + $0x8] sm:$0xff]
    %v224 = vld [vmem:[#allocation5 + $0x10] sm:$0xff]
    %v225 = vld [vmem:[#allocation5 + $0x18] sm:$0xff]
    %226 = vmatprep.subr.mxu0 0.0
    %227 = vmatpush1.msra.mxu0 %v206
    %228 = vmatprep.subr.mxu0 0.0
    %229 = vmatpush1.msra.mxu0 %v207
    %230 = vmatprep.subr.mxu0 0.0
    %231 = vmatpush1.msra.mxu0 %v208
    %232 = vmatprep.subr.mxu0 0.0
    %233 = vmatpush1.msra.mxu0 %v209
    %234 = vmatprep.subr.mxu0 0.0
    %235 = vmatpush1.msra.mxu0 %v210
    %236 = vmatprep.subr.mxu0 0.0
    %237 = vmatpush1.msra.mxu0 %v211
    %238 = vmatprep.subr.mxu0 0.0
    %239 = vmatpush1.msra.mxu0 %v212
    %240 = vmatprep.subr.mxu0 0.0
    %241 = vmatpush1.msra.mxu0 %v213
    %242 = vmatprep.subr.mxu0 0.0
    %243 = vmatpush1.msra.mxu0 %v214
    %244 = vmatprep.subr.mxu0 0.0
    %245 = vmatpush1.msra.mxu0 %v215
    %246 = vmatprep.subr.mxu0 0.0
    %247 = vmatpush1.msra.mxu0 %v216
    %248 = vmatprep.subr.mxu0 0.0
    %249 = vmatpush1.msra.mxu0 %v217
    %250 = vmatprep.subr.mxu0 0.0
    %251 = vmatpush1.msra.mxu0 %v218
    %252 = vmatprep.subr.mxu0 0.0
    %253 = vmatpush1.msra.mxu0 %v219
    %254 = vmatprep.subr.mxu0 0.0
    %255 = vmatpush1.msra.mxu0 %v220
    %256 = vmatprep.subr.mxu0 0.0
    %257 = vmatpush1.msra.mxu0 %v221
    %258 = vmatprep.subr.mxu0 0.0
    %259 = vmatpush1.msra.mxu0 0.0
    %260 = vmatprep.subr.mxu0 0.0
    %261 = vmatpush1.msra.mxu0 0.0
    %262 = vmatprep.subr.mxu0 0.0
    %263 = vmatpush1.msra.mxu0 0.0
    %264 = vmatprep.subr.mxu0 0.0
    %265 = vmatpush1.msra.mxu0 0.0
    %266 = vmatprep.subr.mxu0 0.0
    %267 = vmatpush1.msra.mxu0 0.0
    %268 = vmatprep.subr.mxu0 0.0
    %269 = vmatpush1.msra.mxu0 0.0
    %270 = vmatprep.subr.mxu0 0.0
    %271 = vmatpush1.msra.mxu0 0.0
    %272 = vmatprep.subr.mxu0 0.0
    %273 = vmatpush1.msra.mxu0 0.0
    %274 = vmatprep.subr.mxu0 0.0
    %275 = vmatpush1.msra.mxu0 0.0
    %276 = vmatprep.subr.mxu0 0.0
    %277 = vmatpush1.msra.mxu0 0.0
    %278 = vmatprep.subr.mxu0 0.0
    %279 = vmatpush1.msra.mxu0 0.0
    %280 = vmatprep.subr.mxu0 0.0
    %281 = vmatpush1.msra.mxu0 0.0
    %282 = vmatprep.subr.mxu0 0.0
    %283 = vmatpush1.msra.mxu0 0.0
    %284 = vmatprep.subr.mxu0 0.0
    %285 = vmatpush1.msra.mxu0 0.0
    %286 = vmatprep.subr.mxu0 0.0
    %287 = vmatpush1.msra.mxu0 0.0
    %288 = vmatprep.subr.mxu0 0.0
    %289 = vmatpush1.msra.mxu0 0.0
    %290 = vmatprep.mubr.f32.mxu0 0.0
    %291 = vmatmul.mubr.f32.gmra.mrb[0].mxu0 %v222
    %v292 = vpop.f32.mrb[0].mxu0
    %v293 = vadd.f32 0.0, %v292
    %v294 = vpop.f32.mrb[0].mxu0
    %295 = vmatprep.mubr.f32.mxu0 0.0
    %296 = vmatmul.mubr.f32.gmra.mrb[0].mxu0 %v223
    %v297 = vpop.f32.mrb[0].mxu0
    %v298 = vadd.f32 0.0, %v297
    %v299 = vpop.f32.mrb[0].mxu0
    %300 = vmatprep.mubr.f32.mxu0 0.0
    %301 = vmatmul.mubr.f32.gmra.mrb[0].mxu0 %v224
    %v302 = vpop.f32.mrb[0].mxu0
    %v303 = vadd.f32 0.0, %v302
    %v304 = vpop.f32.mrb[0].mxu0
    %305 = vmatprep.mubr.f32.mxu0 0.0
    %306 = vmatmul.mubr.f32.gmra.mrb[0].mxu0 %v225
    %v307 = vpop.f32.mrb[0].mxu0
    %v308 = vadd.f32 0.0, %v307
    %v309 = vpop.f32.mrb[0].mxu0
    %310 = vdwg.mxu0
    %311 = vst [vmem:[#allocation7] sm:$0xff] %v293
    %312 = vst [vmem:[#allocation7 + $0x8] sm:$0xff] %v298
    %313 = vst [vmem:[#allocation7 + $0x10] sm:$0xff] %v303
    %314 = vst [vmem:[#allocation7 + $0x18] sm:$0xff] %v308
    // Predicated region
    $region18: #{tpu_custom_call.1} parent=1 // pred_check
      _
    $region19: #{tpu_custom_call.1} parent=1 // pred_check_branch
      %316 = sbr.rel (0) target = $region21
    $region20: #{tpu_custom_call.1} parent=1 // pred_region
      %s318 = ssub.s32 512, 512
      %319 = vsyncadd [#allocation4], %s318
      %s320 = sshll.u32 [#allocation7], 4
      %s321 = int_to_ptr.vmem [resolvable:$true] %s320
      %326 = dma.vmem_to_hbm [thread:$0]  %s321, 512, %s2, [#allocation4], 128, 128, 8
    $region21: #{tpu_custom_call.1} parent=1 // pred_fallthru
      _
    // Predicated region
    $region22: #{tpu_custom_call.1} parent=1 // pred_check
      _
    $region23: #{tpu_custom_call.1} parent=1 // pred_check_branch
      %328 = sbr.rel (0) target = $region25
    $region24: #{tpu_custom_call.1} parent=1 // pred_region
      %329 = dma.done [#allocation4], 512
    $region25: #{tpu_custom_call.1} parent=1 // pred_fallthru
      _
    %330 = vsyncpa [#allocation3], 1
    %331 = vsyncpa [#allocation6], 1
    %332 = vsyncpa [#allocation4], 1

</llo_original>
